<compile_context>
chip_gen: v5e
topology: v5e:2x2
jax: 0.10.0
libtpu: 0.0.40
codegen_flags: <defaults>
</compile_context>

<pallas_src>
import functools
import math
from typing import Any, NamedTuple, Optional

import jax
import jax.numpy as jnp
from jax.experimental import pallas as pl
from jax.experimental.pallas import tpu as pltpu

_MiB = 1 << 20

# Per-generation tile caps / VMEM budgets (f32 operands; tk cap doubles for
# sub-32-bit compute dtypes).  ws_budget is the double-buffered working-set
# target; vmem_ceiling caps vmem_limit_bytes below physical VMEM.
_TILE_CAPS = {
    5: dict(tm=256, tn=512,  tk=1024, ws_budget=24 * _MiB, vmem_ceiling=96 * _MiB),
    6: dict(tm=256, tn=1024, tk=1024, ws_budget=40 * _MiB, vmem_ceiling=96 * _MiB),
    7: dict(tm=256, tn=1024, tk=2048, ws_budget=32 * _MiB, vmem_ceiling=48 * _MiB),
}


def _round_up(x, m):
    return ((x + m - 1) // m) * m


def _tpu_generation():
    try:
        kind = jax.devices()[0].device_kind.lower()
    except Exception:
        return 6
    for g in (7, 6, 5):
        if f"v{g}" in kind:
            return g
    return 5  # older / unknown: conservative caps


def _choose_tile(dim, base, cap):
    """Pick the tile first (then the dim is padded up to a multiple of it).

    Largest tile (multiple of `base`, <= cap) whose padding waste is at most
    max(base, dim/8); for dims that already fit under the cap, one full tile.
    """
    dim_r = _round_up(dim, base)
    cap_m = max(1, cap // base)
    if dim_r <= cap_m * base:
        return dim_r
    allowed = max(base, dim_r // 8)
    for mult in range(cap_m, 0, -1):
        t = mult * base
        if _round_up(dim_r, t) - dim_r <= allowed:
            return t
    return base


def _halve_tile(t):
    return max(128, ((t // 2) // 128) * 128)


class FCParams(NamedTuple):
    w_t: jax.Array          # (Kp, Np) weight, transposed/padded/cast once at init
    bias: jax.Array         # (1, Np) float32
    in_size: int
    out_size: int
    tk: int
    tn: int
    compute_dtype: Any      # None -> use x dtype (f32 path)
    tm_cap: int
    m_base: int             # 8 (f32) or 16 (sub-32-bit compute dtype)
    vmem_limit: int


def prepare_fully_connect(weight, bias, *, compute_dtype=None, _force_tiles=None):
    """One-time weight/bias preprocessing (keep OUT of the per-call hot loop).

    weight: (out_size, in_size) PyTorch nn.Linear layout.
    bias:   (out_size,)
    """
    out_size, in_size = weight.shape
    gen = _tpu_generation()
    caps = _TILE_CAPS.get(gen, _TILE_CAPS[6])

    cbytes = jnp.dtype(compute_dtype).itemsize if compute_dtype is not None else 4
    tk_cap = caps["tk"] * (2 if cbytes <= 2 else 1)

    tn = _choose_tile(out_size, 128, caps["tn"])
    tk = _choose_tile(in_size, 128, tk_cap)

    # v7x has 2 TensorCores: keep >= 2 tiles along the parallel N axis when
    # possible so a small-batch call doesn't collapse to a single-core grid.
    if gen >= 7 and _round_up(out_size, tn) == tn and tn >= 256:
        tn = max(128, ((tn // 2 + 127) // 128) * 128)

    if _force_tiles:  # testing hook / manual override
        tk = _force_tiles.get("tk", tk)
        tn = _force_tiles.get("tn", tn)

    tm_guess = caps["tm"]

    def _ws(tk_, tn_):
        # double-buffered x + weight + bias, double-buffered output, f32 acc
        return (2 * (tm_guess * tk_ * cbytes + tk_ * tn_ * cbytes + tn_ * 4)
                + 2 * tm_guess * tn_ * 4 + tm_guess * tn_ * 4)

    while _ws(tk, tn) > caps["ws_budget"]:
        if tk >= tn and tk > 128:
            tk = _halve_tile(tk)
        elif tn > 128:
            tn = _halve_tile(tn)
        elif tk > 128:
            tk = _halve_tile(tk)
        else:
            break

    Kp = _round_up(in_size, tk)
    Np = _round_up(out_size, tn)

    w_t = weight.T  # (in_size, out_size): MXU-canonical RHS, transposed ONCE here
    if (Kp, Np) != w_t.shape:
        w_t = jnp.pad(w_t, ((0, Kp - in_size), (0, Np - out_size)))
    if compute_dtype is not None:
        w_t = w_t.astype(compute_dtype)

    b = bias.reshape(1, out_size).astype(jnp.float32)
    if Np != out_size:
        b = jnp.pad(b, ((0, 0), (0, Np - out_size)))

    vmem_limit = int(min(caps["vmem_ceiling"],
                         max(32 * _MiB, int(1.5 * _ws(tk, tn)))))
    m_base = 16 if cbytes <= 2 else 8

    return FCParams(w_t=w_t, bias=b, in_size=in_size, out_size=out_size,
                    tk=tk, tn=tn, compute_dtype=compute_dtype,
                    tm_cap=caps["tm"], m_base=m_base, vmem_limit=vmem_limit)


# ----------------------------- kernels --------------------------------------

def _fc_kernel_single(x_ref, w_ref, b_ref, o_ref, *, relu):
    # Whole K fits in one tile: no accumulator scratch, one fused pass.
    out = jnp.dot(x_ref[...], w_ref[...], preferred_element_type=jnp.float32)
    out = out + b_ref[...]
    if relu:
        out = jnp.maximum(out, 0.0)
    o_ref[...] = out.astype(o_ref.dtype)


def _fc_kernel_reduce(x_ref, w_ref, b_ref, o_ref, acc_ref, *, relu):
    # x_ref: (tm, tk)  w_ref: (tk, tn)  b_ref: (1, tn)  acc_ref: (tm, tn) f32
    k = pl.program_id(2)
    part = jnp.dot(x_ref[...], w_ref[...], preferred_element_type=jnp.float32)

    @pl.when(k == 0)
    def _():                      # first partial written directly (no zero pass)
        acc_ref[...] = part

    @pl.when(k > 0)
    def _():
        acc_ref[...] += part

    @pl.when(k == pl.num_programs(2) - 1)
    def _():
        out = acc_ref[...] + b_ref[...]
        if relu:
            out = jnp.maximum(out, 0.0)
        o_ref[...] = out.astype(o_ref.dtype)


# ----------------------------- forward --------------------------------------

def fully_connect(x, params: FCParams, relu=True):
    """out = relu(x @ weight.T + bias)   (relu optional; x: (..., in_size))."""
    lead = x.shape[:-1]
    in_size = x.shape[-1]
    assert in_size == params.in_size, "x last dim must equal in_size"
    x2 = x.reshape(-1, in_size)
    B = x2.shape[0]
    out_dtype = x.dtype

    Kp, Np = params.w_t.shape
    tk, tn = params.tk, params.tn

    tm = min(params.tm_cap, _round_up(max(B, 1), params.m_base))
    Mp = _round_up(max(B, 1), tm)

    xp = x2
    if params.compute_dtype is not None and xp.dtype != params.compute_dtype:
        xp = xp.astype(params.compute_dtype)
    if (Mp, Kp) != xp.shape:
        xp = jnp.pad(xp, ((0, Mp - B), (0, Kp - in_size)))

    nk = Kp // tk
    cparams_kwargs = dict(vmem_limit_bytes=params.vmem_limit)

    if nk == 1:
        kernel = functools.partial(_fc_kernel_single, relu=relu)
        out_p = pl.pallas_call(
            kernel,
            out_shape=jax.ShapeDtypeStruct((Mp, Np), out_dtype),
            grid_spec=pltpu.PrefetchScalarGridSpec(
                num_scalar_prefetch=0,
                grid=(Mp // tm, Np // tn),
                in_specs=[
                    pl.BlockSpec((tm, Kp), lambda i, j: (i, 0)),   # x tile
                    pl.BlockSpec((Kp, tn), lambda i, j: (0, j)),   # weight tile
                    pl.BlockSpec((1, tn), lambda i, j: (0, j)),    # bias tile
                ],
                out_specs=pl.BlockSpec((tm, tn), lambda i, j: (i, j)),
            ),
            compiler_params=pltpu.CompilerParams(
                dimension_semantics=("parallel", "parallel"),
                **cparams_kwargs),
        )(xp, params.w_t, params.bias)
    else:
        kernel = functools.partial(_fc_kernel_reduce, relu=relu)
        out_p = pl.pallas_call(
            kernel,
            out_shape=jax.ShapeDtypeStruct((Mp, Np), out_dtype),
            grid_spec=pltpu.PrefetchScalarGridSpec(
                num_scalar_prefetch=0,
                grid=(Mp // tm, Np // tn, nk),
                in_specs=[
                    pl.BlockSpec((tm, tk), lambda i, j, k: (i, k)),  # x tile
                    pl.BlockSpec((tk, tn), lambda i, j, k: (k, j)),  # weight tile
                    pl.BlockSpec((1, tn), lambda i, j, k: (0, j)),   # bias tile
                ],
                out_specs=pl.BlockSpec((tm, tn), lambda i, j, k: (i, j)),
                scratch_shapes=[pltpu.VMEM((tm, tn), jnp.float32)],
            ),
            compiler_params=pltpu.CompilerParams(
                dimension_semantics=("parallel", "parallel", "arbitrary"),
                **cparams_kwargs),
        )(xp, params.w_t, params.bias)

    out = out_p[:B, :params.out_size]
    return out.reshape(*lead, params.out_size)


class FullyConnect:
    """JAX/Pallas equivalent of the PyTorch FullyConnect module.

    xavier_normal_ weight init (gain=1), zero bias, optional ReLU.  All weight
    preprocessing (transpose/pad/cast) happens once here, not per call.
    """

    def __init__(self, in_size, out_size, relu=True, *, key=None,
                 compute_dtype=None, collector=None):
        self.relu = relu
        self.in_size = in_size
        self.out_size = out_size
        if key is None:
            key = jax.random.PRNGKey(0)
        std = math.sqrt(2.0 / (in_size + out_size))  # xavier_normal_, gain=1.0
        self.weight = std * jax.random.normal(key, (out_size, in_size), jnp.float32)
        self.bias = jnp.zeros((out_size,), jnp.float32)  # nn.init.zeros_
        self.params = prepare_fully_connect(self.weight, self.bias,
                                            compute_dtype=compute_dtype)
        if collector is not None:
            collector.append(self)

    def __call__(self, x):
        return fully_connect(x, self.params, relu=self.relu)

    # TODO(synk): shape_to_text / tensors_to_text serialization helpers are
    # host-side I/O utilities with no Pallas equivalent; omitted.


if __name__ == "__main__":
    key = jax.random.PRNGKey(0)
    k1, k2, k3, k4, k5, k6, k7 = jax.random.split(key, 7)

    # --- Case 1: module-style layer (xavier init, zero bias, ReLU), aligned shapes.
    B, in_size, out_size = 16, 256, 128
    layer = FullyConnect(in_size, out_size, relu=True, key=k2)
    x = jax.random.normal(k1, (B, in_size), dtype=jnp.float32)
    out = jax.block_until_ready(layer(x))
    ref = jnp.maximum(x @ layer.weight.T + layer.bias, 0.0)
    assert out.shape == (B, out_size)
    assert jnp.allclose(out, ref, atol=1e-5, rtol=1e-5)

    # --- Case 2: unaligned shapes (padding path), nonzero bias, no ReLU.
    B2, in2, out2 = 10, 100, 48
    x2 = jax.random.normal(k3, (B2, in2), dtype=jnp.float32)
    std2 = (2.0 / (in2 + out2)) ** 0.5
    w2 = std2 * jax.random.normal(k4, (out2, in2), dtype=jnp.float32)
    b2 = 0.1 * jax.random.normal(k5, (out2,), dtype=jnp.float32)
    p2 = prepare_fully_connect(w2, b2)
    out2_ = jax.block_until_ready(fully_connect(x2, p2, relu=False))
    ref2 = x2 @ w2.T + b2
    assert out2_.shape == (B2, out2)
    assert jnp.allclose(out2_, ref2, atol=1e-5, rtol=1e-5)

    # --- Case 3: bf16 MXU operands + f32 accumulation (perf mode), looser tol.
    p3 = prepare_fully_connect(w2, b2, compute_dtype=jnp.bfloat16)
    out3_ = jax.block_until_ready(fully_connect(x2, p3, relu=False))
    assert jnp.allclose(out3_, ref2, atol=2e-2, rtol=2e-2)

    # --- Case 4: force small tiles to exercise the K-reduction accumulator path.
    B4, in4, out4 = 12, 384, 256
    x4 = jax.random.normal(k6, (B4, in4), dtype=jnp.float32)
    std4 = (2.0 / (in4 + out4)) ** 0.5
    w4 = std4 * jax.random.normal(k7, (out4, in4), dtype=jnp.float32)
    b4 = 0.05 * jnp.ones((out4,), dtype=jnp.float32)
    p4 = prepare_fully_connect(w4, b4, _force_tiles=dict(tk=128, tn=128))
    out4_ = jax.block_until_ready(fully_connect(x4, p4, relu=True))
    ref4 = jnp.maximum(x4 @ w4.T + b4, 0.0)
    assert jnp.allclose(out4_, ref4, atol=1e-5, rtol=1e-5)

    print("KERNEL_OK")
</pallas_src>

<mosaic_0001>
module attributes {stable_mosaic.version = 11 : i64} {
  func.func @_fc_kernel_single(%arg0: i32, %arg1: i32, %arg2: memref<16x256xf32, #tpu.memory_space<vmem>>, %arg3: memref<256x128xf32, #tpu.memory_space<vmem>>, %arg4: memref<1x128xf32, #tpu.memory_space<vmem>>, %arg5: memref<16x128xf32, #tpu.memory_space<vmem>>) attributes {dimension_semantics = [#tpu.dimension_semantics<parallel>, #tpu.dimension_semantics<parallel>], iteration_bounds = array<i64: 1, 1>, scalar_prefetch = 0 : i64, scratch_operands = 0 : i64, tpu.core_type = #tpu.core_type<tc>, window_params = [{transform_indices = @transform_0, window_bounds = array<i64: 16, 256>}, {transform_indices = @transform_1, window_bounds = array<i64: 256, 128>}, {transform_indices = @transform_2, window_bounds = array<i64: 1, 128>}, {transform_indices = @transform_3, window_bounds = array<i64: 16, 128>}]} {
    %c0 = arith.constant 0 : index
    %c0_0 = arith.constant 0 : index
    %0 = vector.load %arg2[%c0, %c0_0] : memref<16x256xf32, #tpu.memory_space<vmem>>, vector<16x256xf32>
    %c0_1 = arith.constant 0 : index
    %c0_2 = arith.constant 0 : index
    %1 = vector.load %arg3[%c0_1, %c0_2] : memref<256x128xf32, #tpu.memory_space<vmem>>, vector<256x128xf32>
    %cst = arith.constant dense<0.000000e+00> : vector<16x128xf32>
    %2 = tpu.matmul %0, %1, %cst {dimension_numbers = #tpu.dot_dimension_numbers<[1], [0], [0], [1], [0, 0, 1, 1], [], []>} : vector<16x256xf32>, vector<256x128xf32>, vector<16x128xf32> -> vector<16x128xf32>
    %c0_3 = arith.constant 0 : index
    %c0_4 = arith.constant 0 : index
    %3 = vector.load %arg4[%c0_3, %c0_4] : memref<1x128xf32, #tpu.memory_space<vmem>>, vector<1x128xf32>
    %4 = vector.broadcast %3 : vector<1x128xf32> to vector<16x128xf32>
    %5 = arith.addf %2, %4 : vector<16x128xf32>
    %cst_5 = arith.constant 0.000000e+00 : f32
    %6 = vector.broadcast %cst_5 : f32 to vector<16x128xf32>
    %7 = arith.maximumf %5, %6 : vector<16x128xf32>
    %c0_6 = arith.constant 0 : index
    %c0_7 = arith.constant 0 : index
    %8 = vector.load %arg5[%c0_6, %c0_7] : memref<16x128xf32, #tpu.memory_space<vmem>>, vector<16x128xf32>
    tpu.vector_store %arg5[%c0_6, %c0_7], %7 {strides = array<i32>} : memref<16x128xf32, #tpu.memory_space<vmem>>, vector<16x128xf32>,
    return
  }
  func.func @transform_0(%arg0: i32, %arg1: i32) -> (i32, i32) {
    %c0_i32 = arith.constant 0 : i32
    %c0_i32_0 = arith.constant 0 : i32
    return %arg0, %c0_i32 : i32, i32
  }
  func.func @transform_1(%arg0: i32, %arg1: i32) -> (i32, i32) {
    %c0_i32 = arith.constant 0 : i32
    %c0_i32_0 = arith.constant 0 : i32
    return %c0_i32, %arg1 : i32, i32
  }
  func.func @transform_2(%arg0: i32, %arg1: i32) -> (i32, i32) {
    %c0_i32 = arith.constant 0 : i32
    %c0_i32_0 = arith.constant 0 : i32
    return %c0_i32, %arg1 : i32, i32
  }
  func.func @transform_3(%arg0: i32, %arg1: i32) -> (i32, i32) {
    %c0_i32 = arith.constant 0 : i32
    return %arg0, %arg1 : i32, i32
  }
}

</mosaic_0001>

<llo_original>
// kernel: tpu_custom_call.1
$region0: #{tpu_custom_call.1}
  #allocation0 [shape = 'u32[]', space=smem, size = 0x4, offset = 0x4, fixed_abs, tag = 'smem constant byte address 0x4 - core index']
  #allocation1 [shape = 'u32[72,128]{1,0:T(1,128)}', space=vmem, size = 0x9000, scoped, tag = 'internal scratch']
  %s0 = inlined_call_operand.hbm [shape: f32[16,256], index: 0, kind: input, shape index: {}]
  %s1 = inlined_call_operand.hbm [shape: f32[256,128], index: 1, kind: input, shape index: {}]
  %s2 = inlined_call_operand.vmem [shape: f32[1,128], index: 2, kind: input, shape index: {}]
  %s3 = inlined_call_operand.hbm [shape: f32[16,128], index: 3, kind: output, shape index: {}]
  %s4 = sld [smem:[#allocation0]]
  $region30: #{tpu_custom_call.1} parent=0
    _
  %s6 = ssub.s32 1, %s4
  %s7 = scalar_select 0, %s6, %s4
  $region1: #{tpu_custom_call.1} parent=0
    #allocation2 [shape = 'u8[16384]{0}', space=vmem, size = 0x4000, scoped, tag = 'input window, operand 0, single buffered']
    #allocation3 [shape = 's32[1]{0}', space=sflag, size = 0x4, scoped, tag = 'scoped memory for tpu_custom_call.1']
    #allocation4 [shape = 's32[1]{0}', space=sflag, size = 0x4, scoped, tag = 'scoped memory for tpu_custom_call.1']
    #allocation5 [shape = 'u8[131072]{0}', space=vmem, size = 0x20000, scoped, tag = 'input window, operand 1, single buffered']
    #allocation6 [shape = 's32[1]{0}', space=sflag, size = 0x4, scoped, tag = 'scoped memory for tpu_custom_call.1']
    #allocation7 [shape = 'u8[8192]{0}', space=vmem, size = 0x2000, scoped, tag = 'output window, operand 0, single buffered']
    %8 = vsyncpa [#allocation3], 0
    %9 = vsyncpa [#allocation6], 0
    %10 = vsyncpa [#allocation4], 0
    // Predicated region
    $region2: #{tpu_custom_call.1} parent=1 // pred_check
      _
    $region3: #{tpu_custom_call.1} parent=1 // pred_check_branch
      %12 = sbr.rel (0) target = $region5
    $region4: #{tpu_custom_call.1} parent=1 // pred_region
      %14 = vsyncadd [#allocation3], 0
      %s15 = sshll.u32 %s0, 4
      %s16 = int_to_ptr.hbm [resolvable:$true] %s15
      %s17 = sshll.u32 [#allocation2], 4
      %s18 = int_to_ptr.vmem [resolvable:$true] %s17
      %23 = dma.hbm_to_vmem [thread:$0]  %s16, 512, %s18, [#allocation3], 256, 256, 16
    $region5: #{tpu_custom_call.1} parent=1 // pred_fallthru
      _
    // Predicated region
    $region6: #{tpu_custom_call.1} parent=1 // pred_check
      _
    $region7: #{tpu_custom_call.1} parent=1 // pred_check_branch
      %25 = sbr.rel (0) target = $region9
    $region8: #{tpu_custom_call.1} parent=1 // pred_region
      %27 = vsyncadd [#allocation6], 0
      %s28 = sshll.u32 %s1, 4
      %s29 = int_to_ptr.hbm [resolvable:$true] %s28
      %s30 = sshll.u32 [#allocation5], 4
      %s31 = int_to_ptr.vmem [resolvable:$true] %s30
      %36 = dma.hbm_to_vmem [thread:$0]  %s29, 4096, %s31, [#allocation6], 128, 128, 8
    $region9: #{tpu_custom_call.1} parent=1 // pred_fallthru
      _
    // Predicated region
    $region10: #{tpu_custom_call.1} parent=1 // pred_check
      _
    $region11: #{tpu_custom_call.1} parent=1 // pred_check_branch
      %38 = sbr.rel (0) target = $region13
    $region12: #{tpu_custom_call.1} parent=1 // pred_region
      _
    $region13: #{tpu_custom_call.1} parent=1 // pred_fallthru
      _
    // Predicated region
    $region14: #{tpu_custom_call.1} parent=1 // pred_check
      _
    $region15: #{tpu_custom_call.1} parent=1 // pred_check_branch
      %40 = sbr.rel (0) target = $region17
    $region16: #{tpu_custom_call.1} parent=1 // pred_region
      %42 = dma.done [#allocation3], 512
    $region17: #{tpu_custom_call.1} parent=1 // pred_fallthru
      _
    // Predicated region
    $region18: #{tpu_custom_call.1} parent=1 // pred_check
      _
    $region19: #{tpu_custom_call.1} parent=1 // pred_check_branch
      %44 = sbr.rel (0) target = $region21
    $region20: #{tpu_custom_call.1} parent=1 // pred_region
      %46 = dma.done [#allocation6], 4096
    $region21: #{tpu_custom_call.1} parent=1 // pred_fallthru
      _
    %v47 = vld [vmem:[#allocation2] sm:$0xff]
    %v48 = vld [vmem:[#allocation2 + $0x8] sm:$0xff]
    %v49 = vld [vmem:[#allocation2 + $0x10] sm:$0xff]
    %v50 = vld [vmem:[#allocation2 + $0x18] sm:$0xff]
    %v51 = vld [vmem:[#allocation5] sm:$0xff]
    %v52 = vld [vmem:[#allocation5 + $0x8] sm:$0xff]
    %v53 = vld [vmem:[#allocation5 + $0x10] sm:$0xff]
    %v54 = vld [vmem:[#allocation5 + $0x18] sm:$0xff]
    %v55 = vld [vmem:[#allocation5 + $0x20] sm:$0xff]
    %v56 = vld [vmem:[#allocation5 + $0x28] sm:$0xff]
    %v57 = vld [vmem:[#allocation5 + $0x30] sm:$0xff]
    %v58 = vld [vmem:[#allocation5 + $0x38] sm:$0xff]
    %v59 = vld [vmem:[#allocation5 + $0x40] sm:$0xff]
    %v60 = vld [vmem:[#allocation5 + $0x48] sm:$0xff]
    %v61 = vld [vmem:[#allocation5 + $0x50] sm:$0xff]
    %v62 = vld [vmem:[#allocation5 + $0x58] sm:$0xff]
    %v63 = vld [vmem:[#allocation5 + $0x60] sm:$0xff]
    %v64 = vld [vmem:[#allocation5 + $0x68] sm:$0xff]
    %v65 = vld [vmem:[#allocation5 + $0x70] sm:$0xff]
    %v66 = vld [vmem:[#allocation5 + $0x78] sm:$0xff]
    %v67 = vld [vmem:[#allocation5 + $0x80] sm:$0xff]
    %v68 = vld [vmem:[#allocation5 + $0x88] sm:$0xff]
    %v69 = vld [vmem:[#allocation5 + $0x90] sm:$0xff]
    %v70 = vld [vmem:[#allocation5 + $0x98] sm:$0xff]
    %v71 = vld [vmem:[#allocation5 + $0xa0] sm:$0xff]
    %v72 = vld [vmem:[#allocation5 + $0xa8] sm:$0xff]
    %v73 = vld [vmem:[#allocation5 + $0xb0] sm:$0xff]
    %v74 = vld [vmem:[#allocation5 + $0xb8] sm:$0xff]
    %v75 = vld [vmem:[#allocation5 + $0xc0] sm:$0xff]
    %v76 = vld [vmem:[#allocation5 + $0xc8] sm:$0xff]
    %v77 = vld [vmem:[#allocation5 + $0xd0] sm:$0xff]
    %v78 = vld [vmem:[#allocation5 + $0xd8] sm:$0xff]
    %v79 = vld [vmem:[#allocation5 + $0xe0] sm:$0xff]
    %v80 = vld [vmem:[#allocation5 + $0xe8] sm:$0xff]
    %v81 = vld [vmem:[#allocation5 + $0xf0] sm:$0xff]
    %v82 = vld [vmem:[#allocation5 + $0xf8] sm:$0xff]
    %v83 = vld [vmem:[%s2] sm:$0x1]
    %v85 = vperm.slane %v83, 0
    %87 = vmatpush.msra.mxu0 %v66
    %88 = vmatpush.msra.mxu0 %v65
    %89 = vmatpush.msra.mxu0 %v64
    %90 = vmatpush.msra.mxu0 %v63
    %91 = vmatpush.msra.mxu0 %v62
    %92 = vmatpush.msra.mxu0 %v61
    %93 = vmatpush.msra.mxu0 %v60
    %94 = vmatpush.msra.mxu0 %v59
    %95 = vmatpush.msra.mxu0 %v58
    %96 = vmatpush.msra.mxu0 %v57
    %97 = vmatpush.msra.mxu0 %v56
    %98 = vmatpush.msra.mxu0 %v55
    %99 = vmatpush.msra.mxu0 %v54
    %100 = vmatpush.msra.mxu0 %v53
    %101 = vmatpush.msra.mxu0 %v52
    %102 = vmatpush.msra.mxu0 %v51
    %103 = vmatmul.f32.gmra.mxu0 %v47
    %v104 = vpop.f32.mrf.mxu0
    %v105 = vadd.f32 %v85, %v104
    %106 = vmatmul.f32.gmra.mxu0 %v49
    %v107 = vpop.f32.mrf.mxu0
    %v108 = vadd.f32 %v85, %v107
    %109 = vdwg.mxu0
    %110 = vmatpush.msra.mxu0 %v82
    %111 = vmatpush.msra.mxu0 %v81
    %112 = vmatpush.msra.mxu0 %v80
    %113 = vmatpush.msra.mxu0 %v79
    %114 = vmatpush.msra.mxu0 %v78
    %115 = vmatpush.msra.mxu0 %v77
    %116 = vmatpush.msra.mxu0 %v76
    %117 = vmatpush.msra.mxu0 %v75
    %118 = vmatpush.msra.mxu0 %v74
    %119 = vmatpush.msra.mxu0 %v73
    %120 = vmatpush.msra.mxu0 %v72
    %121 = vmatpush.msra.mxu0 %v71
    %122 = vmatpush.msra.mxu0 %v70
    %123 = vmatpush.msra.mxu0 %v69
    %124 = vmatpush.msra.mxu0 %v68
    %125 = vmatpush.msra.mxu0 %v67
    %126 = vmatmul.f32.gmra.mxu0 %v48
    %v127 = vpop.f32.mrf.mxu0
    %v128 = vadd.f32 %v105, %v127
    %129 = vmatmul.f32.gmra.mxu0 %v50
    %v130 = vpop.f32.mrf.mxu0
    %v131 = vadd.f32 %v108, %v130
    %132 = vdwg.mxu0
    %v133 = vmax.f32 %v128, 0.0
    %v134 = vmax.f32 %v131, 0.0
    %135 = vst [vmem:[#allocation7] sm:$0xff] %v133
    %136 = vst [vmem:[#allocation7 + $0x8] sm:$0xff] %v134
    // Predicated region
    $region22: #{tpu_custom_call.1} parent=1 // pred_check
      _
    $region23: #{tpu_custom_call.1} parent=1 // pred_check_branch
      %138 = sbr.rel (0) target = $region25
    $region24: #{tpu_custom_call.1} parent=1 // pred_region
      %140 = vsyncadd [#allocation4], 0
      %s141 = sshll.u32 [#allocation7], 4
      %s142 = int_to_ptr.vmem [resolvable:$true] %s141
      %s143 = sshll.u32 %s3, 4
      %s144 = int_to_ptr.hbm [resolvable:$true] %s143
      %149 = dma.vmem_to_hbm [thread:$0]  %s142, 256, %s144, [#allocation4], 128, 128, 8
    $region25: #{tpu_custom_call.1} parent=1 // pred_fallthru
      _
    // Predicated region
    $region26: #{tpu_custom_call.1} parent=1 // pred_check
      _
    $region27: #{tpu_custom_call.1} parent=1 // pred_check_branch
      %151 = sbr.rel (0) target = $region29
    $region28: #{tpu_custom_call.1} parent=1 // pred_region
      %153 = dma.done [#allocation4], 256
    $region29: #{tpu_custom_call.1} parent=1 // pred_fallthru
      _
    %154 = vsyncpa [#allocation3], 1
    %155 = vsyncpa [#allocation6], 1
    %156 = vsyncpa [#allocation4], 1

</llo_original>
